<compile_context>
chip_gen: v7x
topology: tpu7x:2x2x1
jax: 0.10.0
libtpu: 0.0.40
codegen_flags: <defaults>
</compile_context>

<pallas_src>
import jax
import jax.numpy as jnp
from jax.experimental import pallas as pl
from jax.experimental.pallas import tpu as pltpu

LN_EPS = 1e-5  # torch.nn.LayerNorm default


def _layer_norm(z, g, beta):
    # One-pass mean / E[x^2] (halves XLU reductions in the epilogue).
    mean = jnp.mean(z, axis=-1, keepdims=True)
    var = jnp.mean(z * z, axis=-1, keepdims=True) - mean * mean
    var = jnp.maximum(var, 0.0)
    zn = (z - mean) * jax.lax.rsqrt(var + LN_EPS)
    return zn * g.astype(jnp.float32) + beta.astype(jnp.float32)


def _core_net(x, w1_ref, b1_ref, w2_ref, b2_ref):
    # Linear1 + ReLU + Linear2 with f32 MXU accumulation; operands stay in their
    # stored (possibly bf16) dtype.
    h = jnp.dot(x, w1_ref[...], preferred_element_type=jnp.float32)
    h = jnp.maximum(h + b1_ref[...].astype(jnp.float32), 0.0)
    out = jnp.dot(h.astype(w2_ref.dtype), w2_ref[...],
                  preferred_element_type=jnp.float32)
    return out + b2_ref[...].astype(jnp.float32)


# ----------------------- resident-weights kernels (1-D grid) -----------------

def _post_ln_resident_kernel(x_ref, w1_ref, b1_ref, w2_ref, b2_ref, g_ref,
                             beta_ref, o_ref):
    x = x_ref[...]
    core = _core_net(x, w1_ref, b1_ref, w2_ref, b2_ref)
    z = x.astype(jnp.float32) + core
    o_ref[...] = _layer_norm(z, g_ref[...], beta_ref[...]).astype(o_ref.dtype)


def _pre_ln_resident_kernel(x_ref, w1_ref, b1_ref, w2_ref, b2_ref, g_ref,
                            beta_ref, o_ref):
    xf = x_ref[...].astype(jnp.float32)
    xn = _layer_norm(xf, g_ref[...], beta_ref[...])
    core = _core_net(xn.astype(w1_ref.dtype), w1_ref, b1_ref, w2_ref, b2_ref)
    o_ref[...] = (xf + core).astype(o_ref.dtype)


# ----------------------- k-streaming kernels (2-D grid) ----------------------

def _post_ln_stream_kernel(x_ref, w1_ref, b1_ref, w2_ref, b2_ref, g_ref,
                           beta_ref, o_ref, acc_ref):
    k = pl.program_id(1)

    @pl.when(k == 0)
    def _():
        acc_ref[...] = jnp.zeros_like(acc_ref)

    h = jnp.dot(x_ref[...], w1_ref[...], preferred_element_type=jnp.float32)
    h = jnp.maximum(h + b1_ref[...].astype(jnp.float32), 0.0)
    acc_ref[...] += jnp.dot(h.astype(w2_ref.dtype), w2_ref[...],
                            preferred_element_type=jnp.float32)

    @pl.when(k == pl.num_programs(1) - 1)
    def _():
        z = (x_ref[...].astype(jnp.float32) + acc_ref[...]
             + b2_ref[...].astype(jnp.float32))
        o_ref[...] = _layer_norm(z, g_ref[...], beta_ref[...]).astype(o_ref.dtype)


def _pre_ln_stream_kernel(x_ref, w1_ref, b1_ref, w2_ref, b2_ref, g_ref,
                          beta_ref, o_ref, acc_ref, xn_ref):
    k = pl.program_id(1)

    @pl.when(k == 0)
    def _():
        xf = x_ref[...].astype(jnp.float32)
        # xn scratch kept in the compute dtype (bf16 in production) to halve
        # VMEM footprint and per-step load traffic.
        xn_ref[...] = _layer_norm(xf, g_ref[...], beta_ref[...]).astype(xn_ref.dtype)
        acc_ref[...] = jnp.zeros_like(acc_ref)

    h = jnp.dot(xn_ref[...], w1_ref[...], preferred_element_type=jnp.float32)
    h = jnp.maximum(h + b1_ref[...].astype(jnp.float32), 0.0)
    acc_ref[...] += jnp.dot(h.astype(w2_ref.dtype), w2_ref[...],
                            preferred_element_type=jnp.float32)

    @pl.when(k == pl.num_programs(1) - 1)
    def _():
        o_ref[...] = (x_ref[...].astype(jnp.float32) + acc_ref[...]
                      + b2_ref[...].astype(jnp.float32)).astype(o_ref.dtype)


# --------------------------------- wrapper -----------------------------------

def positionwise_ff(inp, params, *, pre_lnorm=False, row_tile=512, k_tile=1024,
                    compute_dtype=None, force_stream_k=False):
    """inp: (seq, batch, d_model). Returns array of same shape/dtype."""
    w1, b1, w2, b2, gamma, beta = params
    S, B, D = inp.shape
    d_inner = w1.shape[1]
    N = S * B
    out_dtype = inp.dtype

    x2d = inp.reshape(N, D)
    if compute_dtype is not None:
        # bf16 MXU operands with f32 accumulate (recommended for production).
        x2d = x2d.astype(compute_dtype)
        w1 = w1.astype(compute_dtype)
        w2 = w2.astype(compute_dtype)

    x_bytes = jnp.dtype(x2d.dtype).itemsize
    w_bytes = jnp.dtype(w1.dtype).itemsize
    sub = 16 if x2d.dtype == jnp.bfloat16 else 8

    def rup(a, m):
        return pl.cdiv(a, m) * m

    # Row tile: clamp to problem, sublane-aligned; guarantee >=2 row tiles when
    # possible so both v7x TensorCores get work on the "parallel" axis.
    rt = max(sub, min(rup(int(row_tile), sub), rup(N, sub)))
    if pl.cdiv(N, rt) < 2 and N > sub:
        rt = max(sub, rup(pl.cdiv(N, 2), sub))

    # VMEM budget: ~75% of physical (48 MiB on v7x, ~96 MiB on v5e/v6e),
    # leaving headroom for compiler-internal scratch.
    try:
        vmem_cap = int(getattr(pltpu.get_tpu_info(), "vmem_capacity_bytes",
                               64 * 1024 * 1024))
    except Exception:
        vmem_cap = 64 * 1024 * 1024
    budget = max(int(0.75 * vmem_cap), 32 * 1024 * 1024)

    def est_vmem(rt_, tk_, streaming_):
        e = (4 * rt_ * D * x_bytes             # x + out tiles (double-buffered)
             + 2 * D * tk_ * w_bytes           # W1 tile
             + 2 * tk_ * D * w_bytes           # W2 tile
             + 2 * max(tk_, 128) * w_bytes     # b1 tile
             + 6 * D * 4                       # b2 / gamma / beta
             + rt_ * tk_ * (4 + w_bytes)       # h (f32) + cast copy
             + rt_ * D * 4)                    # z / core f32 intermediate
        if streaming_:
            e += rt_ * D * 4                   # f32 accumulator scratch
        if pre_lnorm:
            e += rt_ * D * 4                   # LayerNorm(x) scratch / temp
        return e

    # Mode selection: keep W1/W2 fully VMEM-resident whenever they fit, so each
    # weight is DMA'd from HBM exactly once (not once per row tile).
    streaming = True
    tk = d_inner
    k_padded = d_inner
    if not force_stream_k:
        rt_try = rt
        while est_vmem(rt_try, d_inner, False) > budget and rt_try > 128:
            rt_try = max(sub, rup(rt_try // 2, sub))
        if est_vmem(rt_try, d_inner, False) <= budget:
            streaming = False
            rt = rt_try

    if streaming:
        tk = max(128, min(rup(int(k_tile), 128), rup(d_inner, 128)))
        while est_vmem(rt, tk, True) > budget and tk > 128:
            tk = max(128, (tk // 2) // 128 * 128)
        while est_vmem(rt, tk, True) > budget and rt > 2 * sub:
            rt = max(sub, rup(rt // 2, sub))
        k_padded = rup(d_inner, tk)
        if k_padded != d_inner:
            # Zero-padded hidden units are exact: relu(x@0 + 0) @ 0 == 0.
            w1 = jnp.pad(w1, ((0, 0), (0, k_padded - d_inner)))
            b1 = jnp.pad(b1, ((0, k_padded - d_inner),))
            w2 = jnp.pad(w2, ((0, k_padded - d_inner), (0, 0)))

    n_row_tiles = pl.cdiv(N, rt)
    b1_2d = b1.reshape(1, k_padded)
    b2_2d = b2.reshape(1, D)
    g_2d = gamma.reshape(1, D)
    beta_2d = beta.reshape(1, D)

    vmem_limit = int(min(budget, vmem_cap))

    weight_passes = n_row_tiles if streaming else 1
    cost = pl.CostEstimate(
        flops=int(4 * N * D * d_inner),
        transcendentals=int(N),
        bytes_accessed=int(weight_passes * (w1.size + w2.size) * w_bytes
                           + (b1.size + b2.size + gamma.size + beta.size) * 4
                           + 2 * N * D * x_bytes),
    )

    if not streaming:
        kernel = _pre_ln_resident_kernel if pre_lnorm else _post_ln_resident_kernel
        grid = (n_row_tiles,)
        in_specs = [
            pl.BlockSpec((rt, D), lambda i: (i, 0)),         # x row tile
            pl.BlockSpec((D, d_inner), lambda i: (0, 0)),    # W1 (VMEM-resident)
            pl.BlockSpec((1, d_inner), lambda i: (0, 0)),    # b1
            pl.BlockSpec((d_inner, D), lambda i: (0, 0)),    # W2 (VMEM-resident)
            pl.BlockSpec((1, D), lambda i: (0, 0)),          # b2
            pl.BlockSpec((1, D), lambda i: (0, 0)),          # gamma
            pl.BlockSpec((1, D), lambda i: (0, 0)),          # beta
        ]
        out_specs = pl.BlockSpec((rt, D), lambda i: (i, 0))
        scratch_shapes = []
        dim_sem = ("parallel",)
    else:
        kernel = _pre_ln_stream_kernel if pre_lnorm else _post_ln_stream_kernel
        grid = (n_row_tiles, k_padded // tk)
        in_specs = [
            pl.BlockSpec((rt, D), lambda i, k: (i, 0)),      # x row tile
            pl.BlockSpec((D, tk), lambda i, k: (0, k)),      # W1 chunk
            pl.BlockSpec((1, tk), lambda i, k: (0, k)),      # b1 chunk
            pl.BlockSpec((tk, D), lambda i, k: (k, 0)),      # W2 chunk
            pl.BlockSpec((1, D), lambda i, k: (0, 0)),       # b2
            pl.BlockSpec((1, D), lambda i, k: (0, 0)),       # gamma
            pl.BlockSpec((1, D), lambda i, k: (0, 0)),       # beta
        ]
        out_specs = pl.BlockSpec((rt, D), lambda i, k: (i, 0))
        scratch_shapes = [pltpu.VMEM((rt, D), jnp.float32)]  # Linear2 accumulator
        if pre_lnorm:
            scratch_shapes.append(pltpu.VMEM((rt, D), x2d.dtype))  # LayerNorm(x)
        dim_sem = ("parallel", "arbitrary")

    out2d = pl.pallas_call(
        kernel,
        out_shape=jax.ShapeDtypeStruct((N, D), out_dtype),
        grid_spec=pltpu.PrefetchScalarGridSpec(
            num_scalar_prefetch=0,
            grid=grid,
            in_specs=in_specs,
            out_specs=out_specs,
            scratch_shapes=scratch_shapes,
        ),
        compiler_params=pltpu.CompilerParams(
            dimension_semantics=dim_sem,
            vmem_limit_bytes=vmem_limit),
        cost_estimate=cost,
    )(x2d, w1, b1_2d, w2, b2_2d, g_2d, beta_2d)

    return out2d.reshape(S, B, D)


# --------------------------- reference & test ---------------------------------

def _reference(inp, params, *, pre_lnorm=False):
    w1, b1, w2, b2, gamma, beta = params
    x = inp.astype(jnp.float32)

    def ln(v):
        m = jnp.mean(v, axis=-1, keepdims=True)
        var = jnp.mean((v - m) ** 2, axis=-1, keepdims=True)
        return (v - m) * jax.lax.rsqrt(var + LN_EPS) * gamma + beta

    def core(v):
        h = jnp.maximum(v @ w1 + b1, 0.0)
        return h @ w2 + b2

    if pre_lnorm:
        return core(ln(x)) + x
    return ln(x + core(x))


def _make_params(key, d_model, d_inner):
    k_w1, k_w2, k_g, k_b, k_b1, k_b2 = jax.random.split(key, 6)
    w1 = 0.05 * jax.random.normal(k_w1, (d_model, d_inner), dtype=jnp.float32)
    b1 = 0.01 * jax.random.normal(k_b1, (d_inner,), dtype=jnp.float32)
    w2 = 0.05 * jax.random.normal(k_w2, (d_inner, d_model), dtype=jnp.float32)
    b2 = 0.01 * jax.random.normal(k_b2, (d_model,), dtype=jnp.float32)
    gamma = 1.0 + 0.01 * jax.random.normal(k_g, (d_model,), dtype=jnp.float32)
    beta = 0.01 * jax.random.normal(k_b, (d_model,), dtype=jnp.float32)
    return (w1, b1, w2, b2, gamma, beta)


if __name__ == "__main__":
    key = jax.random.PRNGKey(0)
    k1, k2, k3, k4 = jax.random.split(key, 4)

    # Test 1: post-LN, resident-weights path (d_model=32, d_inner=64, seq=8, batch=2).
    inp1 = jax.random.normal(k1, (8, 2, 32), dtype=jnp.float32)
    params1 = _make_params(k2, 32, 64)
    out1 = jax.block_until_ready(positionwise_ff(inp1, params1, pre_lnorm=False))
    ref1 = _reference(inp1, params1, pre_lnorm=False)
    assert out1.shape == inp1.shape and out1.dtype == inp1.dtype
    assert jnp.allclose(out1, ref1, atol=2e-4, rtol=2e-4), "post-LN (resident) mismatch"

    # Test 2: pre-LN, resident-weights path.
    out2 = jax.block_until_ready(positionwise_ff(inp1, params1, pre_lnorm=True))
    ref2 = _reference(inp1, params1, pre_lnorm=True)
    assert jnp.allclose(out2, ref2, atol=2e-4, rtol=2e-4), "pre-LN (resident) mismatch"

    # Test 3: post-LN, forced k-streaming path, ragged row tiles (N=21), nk=2.
    inp3 = jax.random.normal(k3, (7, 3, 32), dtype=jnp.float32)
    params3 = _make_params(k4, 32, 256)
    out3 = jax.block_until_ready(
        positionwise_ff(inp3, params3, pre_lnorm=False,
                        row_tile=16, k_tile=128, force_stream_k=True))
    ref3 = _reference(inp3, params3, pre_lnorm=False)
    assert jnp.allclose(out3, ref3, atol=2e-4, rtol=2e-4), "post-LN (streamed) mismatch"

    # Test 4: pre-LN, forced k-streaming path.
    out4 = jax.block_until_ready(
        positionwise_ff(inp3, params3, pre_lnorm=True,
                        row_tile=16, k_tile=128, force_stream_k=True))
    ref4 = _reference(inp3, params3, pre_lnorm=True)
    assert jnp.allclose(out4, ref4, atol=2e-4, rtol=2e-4), "pre-LN (streamed) mismatch"

    # Test 5: bf16 MXU operands (production configuration), loose tolerance.
    out5 = jax.block_until_ready(
        positionwise_ff(inp1, params1, pre_lnorm=False, compute_dtype=jnp.bfloat16))
    ref5 = _reference(inp1, params1, pre_lnorm=False)
    assert out5.dtype == inp1.dtype
    assert jnp.allclose(out5, ref5, atol=1e-1, rtol=1e-1), "bf16-compute mismatch"

    print("KERNEL_OK")
</pallas_src>

<mosaic_0001>
module attributes {stable_mosaic.version = 11 : i64} {
  func.func @_post_ln_resident_kernel(%arg0: i32, %arg1: memref<8x32xf32, #tpu.memory_space<vmem>>, %arg2: memref<32x64xf32, #tpu.memory_space<vmem>>, %arg3: memref<1x64xf32, #tpu.memory_space<vmem>>, %arg4: memref<64x32xf32, #tpu.memory_space<vmem>>, %arg5: memref<1x32xf32, #tpu.memory_space<vmem>>, %arg6: memref<1x32xf32, #tpu.memory_space<vmem>>, %arg7: memref<1x32xf32, #tpu.memory_space<vmem>>, %arg8: memref<8x32xf32, #tpu.memory_space<vmem>>) attributes {dimension_semantics = [#tpu.dimension_semantics<parallel>], iteration_bounds = array<i64: 2>, scalar_prefetch = 0 : i64, scratch_operands = 0 : i64, tpu.core_type = #tpu.core_type<tc>, window_params = [{transform_indices = @transform_0, window_bounds = array<i64: 8, 32>}, {pipeline_mode = #tpu.pipeline_mode<synchronous>, transform_indices = @transform_1, window_bounds = array<i64: 32, 64>}, {pipeline_mode = #tpu.pipeline_mode<synchronous>, transform_indices = @transform_2, window_bounds = array<i64: 1, 64>}, {pipeline_mode = #tpu.pipeline_mode<synchronous>, transform_indices = @transform_3, window_bounds = array<i64: 64, 32>}, {pipeline_mode = #tpu.pipeline_mode<synchronous>, transform_indices = @transform_4, window_bounds = array<i64: 1, 32>}, {pipeline_mode = #tpu.pipeline_mode<synchronous>, transform_indices = @transform_5, window_bounds = array<i64: 1, 32>}, {pipeline_mode = #tpu.pipeline_mode<synchronous>, transform_indices = @transform_6, window_bounds = array<i64: 1, 32>}, {transform_indices = @transform_7, window_bounds = array<i64: 8, 32>}]} {
    %c0 = arith.constant 0 : index
    %c0_0 = arith.constant 0 : index
    %0 = vector.load %arg1[%c0, %c0_0] : memref<8x32xf32, #tpu.memory_space<vmem>>, vector<8x32xf32>
    %c0_1 = arith.constant 0 : index
    %c0_2 = arith.constant 0 : index
    %1 = vector.load %arg2[%c0_1, %c0_2] : memref<32x64xf32, #tpu.memory_space<vmem>>, vector<32x64xf32>
    %cst = arith.constant dense<0.000000e+00> : vector<8x64xf32>
    %2 = tpu.matmul %0, %1, %cst {dimension_numbers = #tpu.dot_dimension_numbers<[1], [0], [0], [1], [0, 0, 1, 1], [], []>} : vector<8x32xf32>, vector<32x64xf32>, vector<8x64xf32> -> vector<8x64xf32>
    %c0_3 = arith.constant 0 : index
    %c0_4 = arith.constant 0 : index
    %3 = vector.load %arg3[%c0_3, %c0_4] : memref<1x64xf32, #tpu.memory_space<vmem>>, vector<1x64xf32>
    %4 = vector.broadcast %3 : vector<1x64xf32> to vector<8x64xf32>
    %5 = arith.addf %2, %4 : vector<8x64xf32>
    %cst_5 = arith.constant 0.000000e+00 : f32
    %6 = vector.broadcast %cst_5 : f32 to vector<8x64xf32>
    %7 = arith.maximumf %5, %6 : vector<8x64xf32>
    %c0_6 = arith.constant 0 : index
    %c0_7 = arith.constant 0 : index
    %8 = vector.load %arg4[%c0_6, %c0_7] : memref<64x32xf32, #tpu.memory_space<vmem>>, vector<64x32xf32>
    %cst_8 = arith.constant dense<0.000000e+00> : vector<8x32xf32>
    %9 = tpu.matmul %7, %8, %cst_8 {dimension_numbers = #tpu.dot_dimension_numbers<[1], [0], [0], [1], [0, 0, 1, 1], [], []>} : vector<8x64xf32>, vector<64x32xf32>, vector<8x32xf32> -> vector<8x32xf32>
    %c0_9 = arith.constant 0 : index
    %c0_10 = arith.constant 0 : index
    %10 = vector.load %arg5[%c0_9, %c0_10] : memref<1x32xf32, #tpu.memory_space<vmem>>, vector<1x32xf32>
    %11 = vector.broadcast %10 : vector<1x32xf32> to vector<8x32xf32>
    %12 = arith.addf %9, %11 : vector<8x32xf32>
    %13 = arith.addf %0, %12 : vector<8x32xf32>
    %c0_11 = arith.constant 0 : index
    %c0_12 = arith.constant 0 : index
    %14 = vector.load %arg6[%c0_11, %c0_12] : memref<1x32xf32, #tpu.memory_space<vmem>>, vector<1x32xf32>
    %c0_13 = arith.constant 0 : index
    %c0_14 = arith.constant 0 : index
    %15 = vector.load %arg7[%c0_13, %c0_14] : memref<1x32xf32, #tpu.memory_space<vmem>>, vector<1x32xf32>
    %cst_15 = arith.constant dense<0.000000e+00> : vector<8xf32>
    %16 = vector.multi_reduction <add>, %13, %cst_15 [1] : vector<8x32xf32> to vector<8xf32>
    %17 = vector.shape_cast %16 : vector<8xf32> to vector<8x1xf32>
    %cst_16 = arith.constant 3.200000e+01 : f32
    %18 = vector.broadcast %cst_16 : f32 to vector<8x1xf32>
    %19 = arith.divf %17, %18 : vector<8x1xf32>
    %20 = arith.mulf %13, %13 : vector<8x32xf32>
    %cst_17 = arith.constant dense<0.000000e+00> : vector<8xf32>
    %21 = vector.multi_reduction <add>, %20, %cst_17 [1] : vector<8x32xf32> to vector<8xf32>
    %22 = vector.shape_cast %21 : vector<8xf32> to vector<8x1xf32>
    %cst_18 = arith.constant 3.200000e+01 : f32
    %23 = vector.broadcast %cst_18 : f32 to vector<8x1xf32>
    %24 = arith.divf %22, %23 : vector<8x1xf32>
    %25 = arith.mulf %19, %19 : vector<8x1xf32>
    %26 = arith.subf %24, %25 : vector<8x1xf32>
    %cst_19 = arith.constant 0.000000e+00 : f32
    %27 = vector.broadcast %cst_19 : f32 to vector<8x1xf32>
    %28 = arith.maximumf %26, %27 : vector<8x1xf32>
    %29 = vector.broadcast %19 : vector<8x1xf32> to vector<8x32xf32>
    %30 = arith.subf %13, %29 : vector<8x32xf32>
    %cst_20 = arith.constant 9.99999974E-6 : f32
    %31 = vector.broadcast %cst_20 : f32 to vector<8x1xf32>
    %32 = arith.addf %28, %31 : vector<8x1xf32>
    %33 = math.rsqrt %32 : vector<8x1xf32>
    %34 = vector.broadcast %33 : vector<8x1xf32> to vector<8x32xf32>
    %35 = arith.mulf %30, %34 : vector<8x32xf32>
    %36 = vector.broadcast %14 : vector<1x32xf32> to vector<8x32xf32>
    %37 = arith.mulf %35, %36 : vector<8x32xf32>
    %38 = vector.broadcast %15 : vector<1x32xf32> to vector<8x32xf32>
    %39 = arith.addf %37, %38 : vector<8x32xf32>
    %c0_21 = arith.constant 0 : index
    %c0_22 = arith.constant 0 : index
    %40 = vector.load %arg8[%c0_21, %c0_22] : memref<8x32xf32, #tpu.memory_space<vmem>>, vector<8x32xf32>
    tpu.vector_store %arg8[%c0_21, %c0_22], %39 {strides = array<i32>} : memref<8x32xf32, #tpu.memory_space<vmem>>, vector<8x32xf32>,
    return
  }
  func.func @transform_0(%arg0: i32) -> (i32, i32) {
    %c0_i32 = arith.constant 0 : i32
    %c0_i32_0 = arith.constant 0 : i32
    return %arg0, %c0_i32 : i32, i32
  }
  func.func @transform_1(%arg0: i32) -> (i32, i32) {
    %c0_i32 = arith.constant 0 : i32
    %c0_i32_0 = arith.constant 0 : i32
    %c0_i32_1 = arith.constant 0 : i32
    return %c0_i32, %c0_i32_0 : i32, i32
  }
  func.func @transform_2(%arg0: i32) -> (i32, i32) {
    %c0_i32 = arith.constant 0 : i32
    %c0_i32_0 = arith.constant 0 : i32
    %c0_i32_1 = arith.constant 0 : i32
    return %c0_i32, %c0_i32_0 : i32, i32
  }
  func.func @transform_3(%arg0: i32) -> (i32, i32) {
    %c0_i32 = arith.constant 0 : i32
    %c0_i32_0 = arith.constant 0 : i32
    %c0_i32_1 = arith.constant 0 : i32
    return %c0_i32, %c0_i32_0 : i32, i32
  }
  func.func @transform_4(%arg0: i32) -> (i32, i32) {
    %c0_i32 = arith.constant 0 : i32
    %c0_i32_0 = arith.constant 0 : i32
    %c0_i32_1 = arith.constant 0 : i32
    return %c0_i32, %c0_i32_0 : i32, i32
  }
  func.func @transform_5(%arg0: i32) -> (i32, i32) {
    %c0_i32 = arith.constant 0 : i32
    %c0_i32_0 = arith.constant 0 : i32
    %c0_i32_1 = arith.constant 0 : i32
    return %c0_i32, %c0_i32_0 : i32, i32
  }
  func.func @transform_6(%arg0: i32) -> (i32, i32) {
    %c0_i32 = arith.constant 0 : i32
    %c0_i32_0 = arith.constant 0 : i32
    %c0_i32_1 = arith.constant 0 : i32
    return %c0_i32, %c0_i32_0 : i32, i32
  }
  func.func @transform_7(%arg0: i32) -> (i32, i32) {
    %c0_i32 = arith.constant 0 : i32
    %c0_i32_0 = arith.constant 0 : i32
    return %arg0, %c0_i32 : i32, i32
  }
}

</mosaic_0001>

<llo_original>
// kernel: tpu_custom_call.1
$region0: #{tpu_custom_call.1}
  #allocation0 [shape = 'u32[]', space=smem, size = 0x4, offset = 0x4, fixed_abs, tag = 'smem constant byte address 0x4 - core index']
  #allocation1 [shape = 'u32[144,128]{1,0:T(1,128)}', space=vmem, size = 0x12000, scoped, tag = 'internal scratch']
  %s0 = inlined_call_operand.vmem [shape: f32[16,32], index: 0, kind: input, shape index: {}]
  %s1 = inlined_call_operand.vmem [shape: f32[32,64], index: 1, kind: input, shape index: {}]
  %s2 = inlined_call_operand.vmem [shape: f32[1,64], index: 2, kind: input, shape index: {}]
  %s3 = inlined_call_operand.vmem [shape: f32[64,32], index: 3, kind: input, shape index: {}]
  %s4 = inlined_call_operand.vmem [shape: f32[1,32], index: 4, kind: input, shape index: {}]
  %s5 = inlined_call_operand.vmem [shape: f32[1,32], index: 5, kind: input, shape index: {}]
  %s6 = inlined_call_operand.vmem [shape: f32[1,32], index: 6, kind: input, shape index: {}]
  %s7 = inlined_call_operand.hbm [shape: f32[16,32], index: 7, kind: output, shape index: {}]
  %s8 = sld [smem:[#allocation0]]
  $region61: #{tpu_custom_call.1} parent=0
    _
  %s10 = ssub.s32 1, %s8
  %s11 = scalar_select 0, %s10, %s8
  $region1: #{tpu_custom_call.1} parent=0
    #allocation2 [shape = 'u8[8192]{0}', space=vmem, size = 0x2000, scoped, tag = 'output window, operand 0']
    #allocation3 [shape = 's32[2]{0}', space=sflag, size = 0x8, scoped, tag = 'scoped memory for tpu_custom_call.1']
    %12 = vsyncpa [#allocation3], 0
    %s13 = scalar_lea.sflag [#allocation3], 1
    %14 = vsyncpa %s13, 0
    loop: start=0, step=1, limit=4
    $region2: #{tpu_custom_call.1} parent=1 // loop_pre_header
      _
    $region3: #{tpu_custom_call.1} parent=1 // loop_header
      %s16 = sphi 0, %s20
      %p17 = scmp.ge.s32.totalorder %s16, 4
      %s26 = sphi 0, %s28
      %s29 = sphi 0, %s26
      %s30 = sphi 0, %s29
      %s46 = sphi 0, %s30
      %s50 = sphi 0, %s50
      %s52 = sphi 0, %s50
      %s53 = sphi 0, %s52
      %s67 = sphi 0, %s53
      %s71 = sphi 0, %s71
      %s73 = sphi 0, %s71
      %s74 = sphi 0, %s73
      %s88 = sphi 0, %s74
      %s92 = sphi 0, %s92
      %s94 = sphi 0, %s92
      %s95 = sphi 0, %s94
      %s109 = sphi 0, %s95
      %s113 = sphi 0, %s113
      %s115 = sphi 0, %s113
      %s116 = sphi 0, %s115
      %s130 = sphi 0, %s116
      %s134 = sphi 0, %s134
      %s136 = sphi 0, %s134
      %s137 = sphi 0, %s136
      %s151 = sphi 0, %s137
      %s155 = sphi 0, %s155
      %s157 = sphi 0, %s155
      %s158 = sphi 0, %s157
      %s172 = sphi 0, %s158
      %s178 = sphi 0, %s180
      %s181 = sphi 0, %s178
      %s182 = sphi 0, %s181
      %s198 = sphi 0, %s182
    $region4: #{tpu_custom_call.1} parent=1 // loop_header_branch
      %19 = sbr.rel (%p17) target = $region8
    $region5: #{tpu_custom_call.1} parent=1 // loop_body
      %s21 = ssub.s32 %s16, 1
      %s22 = ssub.s32 %s16, 2
      %s23 = sadd.s32 %s16, 1
      %s24 = ssub.s32 %s16, %s23
      %p25 = scmp.eq.s32.totalorder %s24, 0
      %s27 = sadd.s32 %s26, 1
      %s28 = scalar_select %p25, %s26, %s27
      %p31 = pneg %p25
      %p32 = scmp.eq.s32.totalorder %s16, 1
      %p33 = por %p31, %p32
      %p34 = scmp.ne.s32.totalorder %s26, %s29
      %p35 = scmp.eq.s32.totalorder %s16, 0
      %p36 = por %p34, %p35
      %p37 = scmp.ne.s32.totalorder %s26, %s29
      %p38 = scmp.eq.s32.totalorder %s21, 1
      %p39 = por %p37, %p38
      %p40 = scmp.ne.s32.totalorder %s29, %s30
      %p41 = scmp.eq.s32.totalorder %s21, 0
      %p42 = por %p40, %p41
      %p43 = scmp.ne.s32.totalorder %s29, %s30
      %p44 = scmp.eq.s32.totalorder %s22, 1
      %p45 = por %p43, %p44
      %p47 = scmp.ne.s32.totalorder %s30, %s46
      %p48 = scmp.eq.s32.totalorder %s22, 0
      %p49 = por %p47, %p48
      %s51 = sadd.s32 %s50, 1
      %p54 = scmp.eq.s32.totalorder %s16, 1
      %p55 = scmp.ne.s32.totalorder %s50, %s52
      %p56 = scmp.eq.s32.totalorder %s16, 0
      %p57 = por %p55, %p56
      %p58 = scmp.ne.s32.totalorder %s50, %s52
      %p59 = scmp.eq.s32.totalorder %s21, 1
      %p60 = por %p58, %p59
      %p61 = scmp.ne.s32.totalorder %s52, %s53
      %p62 = scmp.eq.s32.totalorder %s21, 0
      %p63 = por %p61, %p62
      %p64 = scmp.ne.s32.totalorder %s52, %s53
      %p65 = scmp.eq.s32.totalorder %s22, 1
      %p66 = por %p64, %p65
      %p68 = scmp.ne.s32.totalorder %s53, %s67
      %p69 = scmp.eq.s32.totalorder %s22, 0
      %p70 = por %p68, %p69
      %s72 = sadd.s32 %s71, 1
      %p75 = scmp.eq.s32.totalorder %s16, 1
      %p76 = scmp.ne.s32.totalorder %s71, %s73
      %p77 = scmp.eq.s32.totalorder %s16, 0
      %p78 = por %p76, %p77
      %p79 = scmp.ne.s32.totalorder %s71, %s73
      %p80 = scmp.eq.s32.totalorder %s21, 1
      %p81 = por %p79, %p80
      %p82 = scmp.ne.s32.totalorder %s73, %s74
      %p83 = scmp.eq.s32.totalorder %s21, 0
      %p84 = por %p82, %p83
      %p85 = scmp.ne.s32.totalorder %s73, %s74
      %p86 = scmp.eq.s32.totalorder %s22, 1
      %p87 = por %p85, %p86
      %p89 = scmp.ne.s32.totalorder %s74, %s88
      %p90 = scmp.eq.s32.totalorder %s22, 0
      %p91 = por %p89, %p90
      %s93 = sadd.s32 %s92, 1
      %p96 = scmp.eq.s32.totalorder %s16, 1
      %p97 = scmp.ne.s32.totalorder %s92, %s94
      %p98 = scmp.eq.s32.totalorder %s16, 0
      %p99 = por %p97, %p98
      %p100 = scmp.ne.s32.totalorder %s92, %s94
      %p101 = scmp.eq.s32.totalorder %s21, 1
      %p102 = por %p100, %p101
      %p103 = scmp.ne.s32.totalorder %s94, %s95
      %p104 = scmp.eq.s32.totalorder %s21, 0
      %p105 = por %p103, %p104
      %p106 = scmp.ne.s32.totalorder %s94, %s95
      %p107 = scmp.eq.s32.totalorder %s22, 1
      %p108 = por %p106, %p107
      %p110 = scmp.ne.s32.totalorder %s95, %s109
      %p111 = scmp.eq.s32.totalorder %s22, 0
      %p112 = por %p110, %p111
      %s114 = sadd.s32 %s113, 1
      %p117 = scmp.eq.s32.totalorder %s16, 1
      %p118 = scmp.ne.s32.totalorder %s113, %s115
      %p119 = scmp.eq.s32.totalorder %s16, 0
      %p120 = por %p118, %p119
      %p121 = scmp.ne.s32.totalorder %s113, %s115
      %p122 = scmp.eq.s32.totalorder %s21, 1
      %p123 = por %p121, %p122
      %p124 = scmp.ne.s32.totalorder %s115, %s116
      %p125 = scmp.eq.s32.totalorder %s21, 0
      %p126 = por %p124, %p125
      %p127 = scmp.ne.s32.totalorder %s115, %s116
      %p128 = scmp.eq.s32.totalorder %s22, 1
      %p129 = por %p127, %p128
      %p131 = scmp.ne.s32.totalorder %s116, %s130
      %p132 = scmp.eq.s32.totalorder %s22, 0
      %p133 = por %p131, %p132
      %s135 = sadd.s32 %s134, 1
      %p138 = scmp.eq.s32.totalorder %s16, 1
      %p139 = scmp.ne.s32.totalorder %s134, %s136
      %p140 = scmp.eq.s32.totalorder %s16, 0
      %p141 = por %p139, %p140
      %p142 = scmp.ne.s32.totalorder %s134, %s136
      %p143 = scmp.eq.s32.totalorder %s21, 1
      %p144 = por %p142, %p143
      %p145 = scmp.ne.s32.totalorder %s136, %s137
      %p146 = scmp.eq.s32.totalorder %s21, 0
      %p147 = por %p145, %p146
      %p148 = scmp.ne.s32.totalorder %s136, %s137
      %p149 = scmp.eq.s32.totalorder %s22, 1
      %p150 = por %p148, %p149
      %p152 = scmp.ne.s32.totalorder %s137, %s151
      %p153 = scmp.eq.s32.totalorder %s22, 0
      %p154 = por %p152, %p153
      %s156 = sadd.s32 %s155, 1
      %p159 = scmp.eq.s32.totalorder %s16, 1
      %p160 = scmp.ne.s32.totalorder %s155, %s157
      %p161 = scmp.eq.s32.totalorder %s16, 0
      %p162 = por %p160, %p161
      %p163 = scmp.ne.s32.totalorder %s155, %s157
      %p164 = scmp.eq.s32.totalorder %s21, 1
      %p165 = por %p163, %p164
      %p166 = scmp.ne.s32.totalorder %s157, %s158
      %p167 = scmp.eq.s32.totalorder %s21, 0
      %p168 = por %p166, %p167
      %p169 = scmp.ne.s32.totalorder %s157, %s158
      %p170 = scmp.eq.s32.totalorder %s22, 1
      %p171 = por %p169, %p170
      %p173 = scmp.ne.s32.totalorder %s158, %s172
      %p174 = scmp.eq.s32.totalorder %s22, 0
      %p175 = por %p173, %p174
      %s176 = ssub.s32 %s16, %s23
      %p177 = scmp.eq.s32.totalorder %s176, 0
      %s179 = sadd.s32 %s178, 1
      %s180 = scalar_select %p177, %s178, %s179
      %p183 = pneg %p177
      %p184 = scmp.eq.s32.totalorder %s16, 1
      %p185 = por %p183, %p184
      %p186 = scmp.ne.s32.totalorder %s178, %s181
      %p187 = scmp.eq.s32.totalorder %s16, 0
      %p188 = por %p186, %p187
      %p189 = scmp.ne.s32.totalorder %s178, %s181
      %p190 = scmp.eq.s32.totalorder %s21, 1
      %p191 = por %p189, %p190
      %p192 = scmp.ne.s32.totalorder %s181, %s182
      %p193 = scmp.eq.s32.totalorder %s21, 0
      %p194 = por %p192, %p193
      %p195 = scmp.ne.s32.totalorder %s181, %s182
      %p196 = scmp.eq.s32.totalorder %s22, 1
      %p197 = por %p195, %p196
      %p199 = scmp.ne.s32.totalorder %s182, %s198
      %p200 = scmp.eq.s32.totalorder %s22, 0
      %p201 = por %p199, %p200
      %p202 = scmp.le.s32.totalorder 1, %s16
      %p203 = scmp.lt.s32.totalorder %s16, 3
      %p204 = pnand %p202, %p203
      %p205 = pneg %p204
      // Predicated region
      $region9: #{tpu_custom_call.1} parent=5 // pred_check
        _
      $region10: #{tpu_custom_call.1} parent=5 // pred_check_branch
        %207 = sbr.rel (%p204) target = $region12
      $region11: #{tpu_custom_call.1} parent=5 // pred_region
        %s208 = ssub.s32 %s16, 1
        // Predicated region
        $region13: #{tpu_custom_call.1} parent=11 // pred_check
          %p209 = pneg %p63
        $region14: #{tpu_custom_call.1} parent=11 // pred_check_branch
          %211 = sbr.rel (%p209) target = $region16
        $region15: #{tpu_custom_call.1} parent=11 // pred_region
          _
        $region16: #{tpu_custom_call.1} parent=11 // pred_fallthru
          _
        // Predicated region
        $region17: #{tpu_custom_call.1} parent=11 // pred_check
          %p212 = pneg %p84
        $region18: #{tpu_custom_call.1} parent=11 // pred_check_branch
          %214 = sbr.rel (%p212) target = $region20
        $region19: #{tpu_custom_call.1} parent=11 // pred_region
          _
        $region20: #{tpu_custom_call.1} parent=11 // pred_fallthru
          _
        // Predicated region
        $region21: #{tpu_custom_call.1} parent=11 // pred_check
          %p215 = pneg %p105
        $region22: #{tpu_custom_call.1} parent=11 // pred_check_branch
          %217 = sbr.rel (%p215) target = $region24
        $region23: #{tpu_custom_call.1} parent=11 // pred_region
          _
        $region24: #{tpu_custom_call.1} parent=11 // pred_fallthru
          _
        // Predicated region
        $region25: #{tpu_custom_call.1} parent=11 // pred_check
          %p218 = pneg %p126
        $region26: #{tpu_custom_call.1} parent=11 // pred_check_branch
          %220 = sbr.rel (%p218) target = $region28
        $region27: #{tpu_custom_call.1} parent=11 // pred_region
          _
        $region28: #{tpu_custom_call.1} parent=11 // pred_fallthru
          _
        // Predicated region
        $region29: #{tpu_custom_call.1} parent=11 // pred_check
          %p221 = pneg %p147
        $region30: #{tpu_custom_call.1} parent=11 // pred_check_branch
          %223 = sbr.rel (%p221) target = $region32
        $region31: #{tpu_custom_call.1} parent=11 // pred_region
          _
        $region32: #{tpu_custom_call.1} parent=11 // pred_fallthru
          _
        // Predicated region
        $region33: #{tpu_custom_call.1} parent=11 // pred_check
          %p224 = pneg %p168
        $region34: #{tpu_custom_call.1} parent=11 // pred_check_branch
          %226 = sbr.rel (%p224) target = $region36
        $region35: #{tpu_custom_call.1} parent=11 // pred_region
          _
        $region36: #{tpu_custom_call.1} parent=11 // pred_fallthru
          _
      $region12: #{tpu_custom_call.1} parent=5 // pred_fallthru
        _
      %p227 = scmp.lt.s32.totalorder %s16, 2
      // Predicated region
      $region37: #{tpu_custom_call.1} parent=5 // pred_check
        %p228 = pneg %p227
      $region38: #{tpu_custom_call.1} parent=5 // pred_check_branch
        %230 = sbr.rel (%p228) target = $region40
      $region39: #{tpu_custom_call.1} parent=5 // pred_region
        // Predicated region
        $region41: #{tpu_custom_call.1} parent=39 // pred_check
          %p231 = pneg %p36
        $region42: #{tpu_custom_call.1} parent=39 // pred_check_branch
          %233 = sbr.rel (%p231) target = $region44
        $region43: #{tpu_custom_call.1} parent=39 // pred_region
          %p234 = scmp.lt.s32.totalorder %s16, 1
          %s235 = scalar_select %p234, %s16, 1
          %s236 = smul.addr %s235, 8
          %s237 = scalar_lea.vmem %s0, %s236
        $region44: #{tpu_custom_call.1} parent=39 // pred_fallthru
          _
      $region40: #{tpu_custom_call.1} parent=5 // pred_fallthru
        _
      %p238 = scmp.le.s32.totalorder 1, %s16
      %p239 = scmp.lt.s32.totalorder %s16, 3
      %p240 = pnand %p238, %p239
      %p241 = pneg %p240
      // Predicated region
      $region45: #{tpu_custom_call.1} parent=5 // pred_check
        _
      $region46: #{tpu_custom_call.1} parent=5 // pred_check_branch
        %243 = sbr.rel (%p240) target = $region48
      $region47: #{tpu_custom_call.1} parent=5 // pred_region
        %s244 = ssub.s32 %s16, 1
        %p245 = scmp.lt.s32.totalorder %s21, 1
        %s246 = scalar_select %p245, %s21, 1
        %s247 = smul.addr %s246, 8
        %s248 = scalar_lea.vmem %s0, %s247
        %p249 = pneg %p42
        %p250 = pneg %p39
        %p251 = pneg %p63
        %p252 = pneg %p60
        %p253 = pneg %p84
        %p254 = pneg %p81
        %p255 = pneg %p105
        %p256 = pneg %p102
        %p257 = pneg %p126
        %p258 = pneg %p123
        %p259 = pneg %p147
        %p260 = pneg %p144
        %p261 = pneg %p168
        %p262 = pneg %p165
        %p263 = pneg %p194
        %p264 = pneg %p191
        %s265 = sand.u32 %s181, 1
        %s266 = scalar_lea.sflag [#allocation3], %s265
        %s267 = sand.u32 %s181, 1
        %s268 = smul.addr %s267, 8
        %s269 = scalar_lea.vmem [#allocation2], %s268
        %p270 = scmp.lt.s32.totalorder %s21, 1
        %s271 = scalar_select %p270, %s21, 1
        %s272 = smul.addr %s271, 8
        %s273 = scalar_lea.vmem %s0, %s272
        %v274 = vld [vmem:[%s273] sm:$0xff]
        %v275 = vld [vmem:[%s1] sm:$0xff]
        %v276 = vld [vmem:[%s1 + $0x8] sm:$0xff]
        %v277 = vld [vmem:[%s1 + $0x10] sm:$0xff]
        %v278 = vld [vmem:[%s1 + $0x18] sm:$0xff]
        %v279 = vld [vmem:[%s2] sm:$0x1]
        %v281 = vlaneseq
        %v282 = vshrl.u32 %v281, 7
        %v283 = vsub.s32 0, %v282
        %v284 = vrot.slane %v279, %v283
        %vm286 = vcmask 261120
        %v288 = vsel %vm286, %v274, 0
        %290 = vmatprep.subr.mxu0 0.0
        %291 = vmatpush1.msra.mxu0 %v275
        %292 = vmatprep.subr.mxu0 0.0
        %293 = vmatpush1.msra.mxu0 %v276
        %294 = vmatprep.subr.mxu0 0.0
        %295 = vmatpush1.msra.mxu0 %v277
        %296 = vmatprep.subr.mxu0 0.0
        %297 = vmatpush1.msra.mxu0 %v278
        %298 = vmatprep.subr.mxu0 0.0
        %299 = vmatpush1.msra.mxu0 0.0
        %300 = vmatprep.subr.mxu0 0.0
        %301 = vmatpush1.msra.mxu0 0.0
        %302 = vmatprep.subr.mxu0 0.0
        %303 = vmatpush1.msra.mxu0 0.0
        %304 = vmatprep.subr.mxu0 0.0
        %305 = vmatpush1.msra.mxu0 0.0
        %306 = vmatprep.subr.mxu0 0.0
        %307 = vmatpush1.msra.mxu0 0.0
        %308 = vmatprep.subr.mxu0 0.0
        %309 = vmatpush1.msra.mxu0 0.0
        %310 = vmatprep.subr.mxu0 0.0
        %311 = vmatpush1.msra.mxu0 0.0
        %312 = vmatprep.subr.mxu0 0.0
        %313 = vmatpush1.msra.mxu0 0.0
        %314 = vmatprep.subr.mxu0 0.0
        %315 = vmatpush1.msra.mxu0 0.0
        %316 = vmatprep.subr.mxu0 0.0
        %317 = vmatpush1.msra.mxu0 0.0
        %318 = vmatprep.subr.mxu0 0.0
        %319 = vmatpush1.msra.mxu0 0.0
        %320 = vmatprep.subr.mxu0 0.0
        %321 = vmatpush1.msra.mxu0 0.0
        %322 = vmatprep.subr.mxu0 0.0
        %323 = vmatpush1.msra.mxu0 0.0
        %324 = vmatprep.subr.mxu0 0.0
        %325 = vmatpush1.msra.mxu0 0.0
        %326 = vmatprep.subr.mxu0 0.0
        %327 = vmatpush1.msra.mxu0 0.0
        %328 = vmatprep.subr.mxu0 0.0
        %329 = vmatpush1.msra.mxu0 0.0
        %330 = vmatprep.subr.mxu0 0.0
        %331 = vmatpush1.msra.mxu0 0.0
        %332 = vmatprep.subr.mxu0 0.0
        %333 = vmatpush1.msra.mxu0 0.0
        %334 = vmatprep.subr.mxu0 0.0
        %335 = vmatpush1.msra.mxu0 0.0
        %336 = vmatprep.subr.mxu0 0.0
        %337 = vmatpush1.msra.mxu0 0.0
        %338 = vmatprep.subr.mxu0 0.0
        %339 = vmatpush1.msra.mxu0 0.0
        %340 = vmatprep.subr.mxu0 0.0
        %341 = vmatpush1.msra.mxu0 0.0
        %342 = vmatprep.subr.mxu0 0.0
        %343 = vmatpush1.msra.mxu0 0.0
        %344 = vmatprep.subr.mxu0 0.0
        %345 = vmatpush1.msra.mxu0 0.0
        %346 = vmatprep.subr.mxu0 0.0
        %347 = vmatpush1.msra.mxu0 0.0
        %348 = vmatprep.subr.mxu0 0.0
        %349 = vmatpush1.msra.mxu0 0.0
        %350 = vmatprep.subr.mxu0 0.0
        %351 = vmatpush1.msra.mxu0 0.0
        %352 = vmatprep.subr.mxu0 0.0
        %353 = vmatpush1.msra.mxu0 0.0
        %354 = vmatprep.mubr.f32.mxu0 0.0
        %355 = vmatmul.mubr.f32.gmra.mrb[0].mxu0 %v288
        %v356 = vpop.f32.mrb[0].mxu0
        %v357 = vadd.f32 %v284, %v356
        %v358 = vpop.f32.mrb[0].mxu0
        %359 = vdwg.mxu0
        %v360 = vmax.f32 %v357, 0.0
        %v361 = vld [vmem:[%s3] sm:$0xff]
        %v362 = vld [vmem:[%s3 + $0x8] sm:$0xff]
        %v363 = vld [vmem:[%s3 + $0x10] sm:$0xff]
        %v364 = vld [vmem:[%s3 + $0x18] sm:$0xff]
        %v365 = vld [vmem:[%s3 + $0x20] sm:$0xff]
        %v366 = vld [vmem:[%s3 + $0x28] sm:$0xff]
        %v367 = vld [vmem:[%s3 + $0x30] sm:$0xff]
        %v368 = vld [vmem:[%s3 + $0x38] sm:$0xff]
        %v369 = vld [vmem:[%s4] sm:$0x1]
        %v371 = vlaneseq
        %v372 = vshrl.u32 %v371, 7
        %v373 = vsub.s32 0, %v372
        %v374 = vrot.slane %v369, %v373
        %vm376 = vcmask 523264
        %v378 = vsel %vm376, %v360, 0
        %380 = vmatprep.subr.mxu0 0.0
        %381 = vmatpush1.msra.mxu0 %v361
        %382 = vmatprep.subr.mxu0 0.0
        %383 = vmatpush1.msra.mxu0 %v362
        %384 = vmatprep.subr.mxu0 0.0
        %385 = vmatpush1.msra.mxu0 %v363
        %386 = vmatprep.subr.mxu0 0.0
        %387 = vmatpush1.msra.mxu0 %v364
        %388 = vmatprep.subr.mxu0 0.0
        %389 = vmatpush1.msra.mxu0 %v365
        %390 = vmatprep.subr.mxu0 0.0
        %391 = vmatpush1.msra.mxu0 %v366
        %392 = vmatprep.subr.mxu0 0.0
        %393 = vmatpush1.msra.mxu0 %v367
        %394 = vmatprep.subr.mxu0 0.0
        %395 = vmatpush1.msra.mxu0 %v368
        %396 = vmatprep.subr.mxu0 0.0
        %397 = vmatpush1.msra.mxu0 0.0
        %398 = vmatprep.subr.mxu0 0.0
        %399 = vmatpush1.msra.mxu0 0.0
        %400 = vmatprep.subr.mxu0 0.0
        %401 = vmatpush1.msra.mxu0 0.0
        %402 = vmatprep.subr.mxu0 0.0
        %403 = vmatpush1.msra.mxu0 0.0
        %404 = vmatprep.subr.mxu0 0.0
        %405 = vmatpush1.msra.mxu0 0.0
        %406 = vmatprep.subr.mxu0 0.0
        %407 = vmatpush1.msra.mxu0 0.0
        %408 = vmatprep.subr.mxu0 0.0
        %409 = vmatpush1.msra.mxu0 0.0
        %410 = vmatprep.subr.mxu0 0.0
        %411 = vmatpush1.msra.mxu0 0.0
        %412 = vmatprep.subr.mxu0 0.0
        %413 = vmatpush1.msra.mxu0 0.0
        %414 = vmatprep.subr.mxu0 0.0
        %415 = vmatpush1.msra.mxu0 0.0
        %416 = vmatprep.subr.mxu0 0.0
        %417 = vmatpush1.msra.mxu0 0.0
        %418 = vmatprep.subr.mxu0 0.0
        %419 = vmatpush1.msra.mxu0 0.0
        %420 = vmatprep.subr.mxu0 0.0
        %421 = vmatpush1.msra.mxu0 0.0
        %422 = vmatprep.subr.mxu0 0.0
        %423 = vmatpush1.msra.mxu0 0.0
        %424 = vmatprep.subr.mxu0 0.0
        %425 = vmatpush1.msra.mxu0 0.0
        %426 = vmatprep.subr.mxu0 0.0
        %427 = vmatpush1.msra.mxu0 0.0
        %428 = vmatprep.subr.mxu0 0.0
        %429 = vmatpush1.msra.mxu0 0.0
        %430 = vmatprep.subr.mxu0 0.0
        %431 = vmatpush1.msra.mxu0 0.0
        %432 = vmatprep.subr.mxu0 0.0
        %433 = vmatpush1.msra.mxu0 0.0
        %434 = vmatprep.subr.mxu0 0.0
        %435 = vmatpush1.msra.mxu0 0.0
        %436 = vmatprep.subr.mxu0 0.0
        %437 = vmatpush1.msra.mxu0 0.0
        %438 = vmatprep.subr.mxu0 0.0
        %439 = vmatpush1.msra.mxu0 0.0
        %440 = vmatprep.subr.mxu0 0.0
        %441 = vmatpush1.msra.mxu0 0.0
        %442 = vmatprep.subr.mxu0 0.0
        %443 = vmatpush1.msra.mxu0 0.0
        %444 = vmatprep.mubr.f32.mxu0 0.0
        %445 = vmatmul.mubr.f32.gmra.mrb[0].mxu0 %v378
        %v446 = vpop.f32.mrb[0].mxu0
        %v447 = vadd.f32 %v374, %v446
        %v448 = vpop.f32.mrb[0].mxu0
        %449 = vdwg.mxu0
        %v450 = vadd.f32 %v274, %v447
        %v451 = vld [vmem:[%s5] sm:$0x1]
        %v452 = vld [vmem:[%s6] sm:$0x1]
        %v453 = vsel %vm286, %v450, 0.0
        %454 = vadd.xlane.f32.xlu0 %v453
        %v455 = vpop.xlane.xlu0 %454
        %v456 = vrcp.pop 32.0
        %v457 = vmul.f32 %v455, %v456
        %v458 = vmul.f32 %v450, %v450
        %v459 = vsel %vm286, %v458, 0.0
        %460 = vadd.xlane.f32.xlu0 %v459
        %v461 = vpop.xlane.xlu0 %460
        %v462 = vmul.f32 %v461, %v456
        %v463 = vmul.f32 %v457, %v457
        %v464 = vsub.f32 %v462, %v463
        %v465 = vmax.f32 %v464, 0.0
        %v466 = vsub.f32 %v450, %v457
        %v467 = vadd.f32 %v465, 1e-05
        %v468 = vrsqrt.pop %v467
        %v469 = vmul.f32 %v466, %v468
        %v471 = vlaneseq
        %v472 = vshrl.u32 %v471, 7
        %v473 = vsub.s32 0, %v472
        %v474 = vrot.slane %v451, %v473
        %v476 = vmul.f32 %v469, %v474
        %v478 = vlaneseq
        %v479 = vshrl.u32 %v478, 7
        %v480 = vsub.s32 0, %v479
        %v481 = vrot.slane %v452, %v480
        %v483 = vadd.f32 %v476, %v481
        %484 = vst.msk [vmem:[%s269] sm:$0xff] %vm286, %v483
        %s485 = sand.u32 %s181, 1
        %s486 = scalar_lea.sflag [#allocation3], %s485
        %s487 = sand.u32 %s181, 1
        %s488 = smul.addr %s487, 8
        %s489 = scalar_lea.vmem [#allocation2], %s488
        // Predicated region
        $region49: #{tpu_custom_call.1} parent=47 // pred_check
          %p490 = pneg %p191
        $region50: #{tpu_custom_call.1} parent=47 // pred_check_branch
          %492 = sbr.rel (%p490) target = $region52
        $region51: #{tpu_custom_call.1} parent=47 // pred_region
          %s494 = ssub.s32 128, 128
          %495 = vsyncadd %s486, %s494
          %s496 = smul.addr %s21, 128
          %s497 = scalar_lea.hbm %s7, %s496
          %s499 = sshll.u32 %s489, 4
          %s500 = int_to_ptr.vmem [resolvable:$true] %s499
          %502 = dma.vmem_to_hbm [thread:$0]  %s500, 128, %s497, %s486
        $region52: #{tpu_custom_call.1} parent=47 // pred_fallthru
          _
      $region48: #{tpu_custom_call.1} parent=5 // pred_fallthru
        _
      %p503 = scmp.le.s32.totalorder 2, %s16
      // Predicated region
      $region53: #{tpu_custom_call.1} parent=5 // pred_check
        %p504 = pneg %p503
      $region54: #{tpu_custom_call.1} parent=5 // pred_check_branch
        %506 = sbr.rel (%p504) target = $region56
      $region55: #{tpu_custom_call.1} parent=5 // pred_region
        %s507 = ssub.s32 %s16, 2
        // Predicated region
        $region57: #{tpu_custom_call.1} parent=55 // pred_check
          %p508 = pneg %p197
        $region58: #{tpu_custom_call.1} parent=55 // pred_check_branch
          %510 = sbr.rel (%p508) target = $region60
        $region59: #{tpu_custom_call.1} parent=55 // pred_region
          %s511 = sand.u32 %s182, 1
          %s512 = scalar_lea.sflag [#allocation3], %s511
          %s513 = sand.u32 %s182, 1
          %s514 = smul.addr %s513, 8
          %s515 = scalar_lea.vmem [#allocation2], %s514
          %516 = dma.done %s512, 128
        $region60: #{tpu_custom_call.1} parent=55 // pred_fallthru
          _
      $region56: #{tpu_custom_call.1} parent=5 // pred_fallthru
        _
    $region6: #{tpu_custom_call.1} parent=1 // loop_footer
      %s20 = sadd.s32 1, %s16
    $region7: #{tpu_custom_call.1} parent=1 // loop_footer_branch
      %15 = sbr.rel target = $region3
    $region8: #{tpu_custom_call.1} parent=1 // loop_exit
      _
    %517 = vsyncpa [#allocation3], 1
    %s518 = scalar_lea.sflag [#allocation3], 1
    %519 = vsyncpa %s518, 1

</llo_original>
